<compile_context>
chip_gen: v7x
topology: tpu7x:2x2x1
jax: 0.10.0
libtpu: 0.0.40
codegen_flags: <defaults>
</compile_context>

<pallas_src>
import jax
import jax.numpy as jnp
from jax import lax
from jax.experimental import pallas as pl
from jax.experimental.pallas import tpu as pltpu


def _bce_kernel(x_ref, t_ref, o_ref):
    # Blocks are (TM, HWP): each row is one (n, c) channel slice. f32 math.
    x = x_ref[...].astype(jnp.float32)
    t = t_ref[...].astype(jnp.float32)

    pos = (t == 1.0).astype(jnp.float32)
    neg = (t == 0.0).astype(jnp.float32)

    # Per-row (= per channel slice) counts.
    num_pos = jnp.sum(pos, axis=-1, keepdims=True)          # (TM, 1)
    num_neg = jnp.sum(neg, axis=-1, keepdims=True)          # (TM, 1)
    # max(., 1) guards fully-padded rows (num_total == 0); their weights are
    # zero anyway, so this never changes real rows with binary targets.
    num_total = jnp.maximum(num_pos + num_neg, 1.0)

    alpha = num_neg / num_total
    beta = (1.1 * num_pos) / num_total
    weights = alpha * pos + beta * neg                       # 0 for non-binary / padded

    # Numerically-stable BCE with logits:
    #   max(x, 0) - x*t + log(1 + exp(-|x|))
    loss = jnp.maximum(x, 0.0) - x * t + jnp.log1p(jnp.exp(-jnp.abs(x)))

    partial = jnp.sum(weights * loss)                        # scalar per block

    # Write partial into lane (0, 0) of this block's own (8, 128) output tile.
    rows = lax.broadcasted_iota(jnp.int32, o_ref.shape, 0)
    cols = lax.broadcasted_iota(jnp.int32, o_ref.shape, 1)
    o_ref[...] = jnp.where((rows == 0) & (cols == 0), partial, 0.0)


def _round_up(x, m):
    return ((x + m - 1) // m) * m


def bce_loss(logits, target, *, tm_target=1024):
    """Weighted BCE-with-logits, reduction='sum'. logits/target: (N, C, H, W)."""
    assert logits.shape == target.shape
    N, C, H, W = logits.shape
    rows, hw = N * C, H * W
    hwp = _round_up(hw, 128)

    x = logits.reshape(rows, hw).astype(jnp.float32)
    t = target.reshape(rows, hw).astype(jnp.float32)

    # Lane padding with sentinel target -1.0 -> pos == neg == 0 -> weight 0.
    if hwp != hw:
        x = jnp.pad(x, ((0, 0), (0, hwp - hw)))
        t = jnp.pad(t, ((0, 0), (0, hwp - hw)), constant_values=-1.0)

    # Row-tile size: multiple of 8, capped so live VMEM
    # (2 inputs x 2 pipeline buffers x TM x HWP x 4B) stays under ~20 MiB.
    vmem_budget = 20 * 1024 * 1024
    tm_cap = max(8, ((vmem_budget // (16 * hwp)) // 8) * 8)
    tm = min(tm_target, tm_cap, _round_up(rows, 8))
    tm = max(8, (tm // 8) * 8)

    rows_p = _round_up(rows, tm)
    if rows_p != rows:
        x = jnp.pad(x, ((0, rows_p - rows), (0, 0)))
        t = jnp.pad(t, ((0, rows_p - rows), (0, 0)), constant_values=-1.0)

    grid = rows_p // tm

    partials = pl.pallas_call(
        _bce_kernel,
        out_shape=jax.ShapeDtypeStruct((grid * 8, 128), jnp.float32),
        grid_spec=pltpu.PrefetchScalarGridSpec(
            num_scalar_prefetch=0,
            grid=(grid,),
            in_specs=[
                pl.BlockSpec((tm, hwp), lambda i: (i, 0)),
                pl.BlockSpec((tm, hwp), lambda i: (i, 0)),
            ],
            out_specs=pl.BlockSpec((8, 128), lambda i: (i, 0)),
        ),
        compiler_params=pltpu.CompilerParams(
            dimension_semantics=("parallel",),      # independent partial sums
            vmem_limit_bytes=32 * 1024 * 1024,      # raise v5e's 16 MiB default
        ),
    )(x, t)

    # Final reduction over a handful of partials in plain JAX.
    return jnp.sum(partials)


if __name__ == "__main__":
    key = jax.random.PRNGKey(0)
    k1, k2 = jax.random.split(key)

    N, C, H, W = 2, 4, 16, 16
    logits = jax.random.normal(k1, (N, C, H, W), dtype=jnp.float32)
    # Binary targets in {0, 1}, as the module's pos/neg masks imply.
    target = jax.random.bernoulli(k2, p=0.3, shape=(N, C, H, W)).astype(jnp.float32)

    loss = bce_loss(logits, target)
    jax.block_until_ready(loss)

    # Pure-JAX reference check (same math, outside Pallas).
    pos = (target == 1.0).astype(jnp.float32)
    neg = (target == 0.0).astype(jnp.float32)
    num_pos = jnp.sum(pos, axis=(2, 3), keepdims=True)
    num_neg = jnp.sum(neg, axis=(2, 3), keepdims=True)
    num_total = num_pos + num_neg
    weights = (num_neg / num_total) * pos + (1.1 * num_pos / num_total) * neg
    ref = jnp.sum(
        weights
        * (jnp.maximum(logits, 0.0) - logits * target + jnp.log1p(jnp.exp(-jnp.abs(logits))))
    )
    assert jnp.allclose(loss, ref, rtol=1e-5, atol=1e-5), (loss, ref)

    print("KERNEL_OK")
</pallas_src>

<mosaic_0001>
module attributes {stable_mosaic.version = 11 : i64} {
  func.func @_bce_kernel(%arg0: i32, %arg1: memref<8x256xf32, #tpu.memory_space<vmem>>, %arg2: memref<8x256xf32, #tpu.memory_space<vmem>>, %arg3: memref<8x128xf32, #tpu.memory_space<vmem>>) attributes {dimension_semantics = [#tpu.dimension_semantics<parallel>], iteration_bounds = array<i64: 1>, scalar_prefetch = 0 : i64, scratch_operands = 0 : i64, tpu.core_type = #tpu.core_type<tc>, window_params = [{transform_indices = @transform_0, window_bounds = array<i64: 8, 256>}, {transform_indices = @transform_1, window_bounds = array<i64: 8, 256>}, {transform_indices = @transform_2, window_bounds = array<i64: 8, 128>}]} {
    %c0 = arith.constant 0 : index
    %c0_0 = arith.constant 0 : index
    %0 = vector.load %arg1[%c0, %c0_0] : memref<8x256xf32, #tpu.memory_space<vmem>>, vector<8x256xf32>
    %c0_1 = arith.constant 0 : index
    %c0_2 = arith.constant 0 : index
    %1 = vector.load %arg2[%c0_1, %c0_2] : memref<8x256xf32, #tpu.memory_space<vmem>>, vector<8x256xf32>
    %cst = arith.constant 1.000000e+00 : f32
    %2 = vector.broadcast %cst : f32 to vector<8x256xf32>
    %3 = arith.cmpf oeq, %1, %2 : vector<8x256xf32>
    %4 = arith.extui %3 : vector<8x256xi1> to vector<8x256xi32>
    %5 = arith.sitofp %4 : vector<8x256xi32> to vector<8x256xf32>
    %cst_3 = arith.constant 0.000000e+00 : f32
    %6 = vector.broadcast %cst_3 : f32 to vector<8x256xf32>
    %7 = arith.cmpf oeq, %1, %6 : vector<8x256xf32>
    %8 = arith.extui %7 : vector<8x256xi1> to vector<8x256xi32>
    %9 = arith.sitofp %8 : vector<8x256xi32> to vector<8x256xf32>
    %cst_4 = arith.constant dense<0.000000e+00> : vector<8xf32>
    %10 = vector.multi_reduction <add>, %5, %cst_4 [1] : vector<8x256xf32> to vector<8xf32>
    %11 = vector.shape_cast %10 : vector<8xf32> to vector<8x1xf32>
    %cst_5 = arith.constant dense<0.000000e+00> : vector<8xf32>
    %12 = vector.multi_reduction <add>, %9, %cst_5 [1] : vector<8x256xf32> to vector<8xf32>
    %13 = vector.shape_cast %12 : vector<8xf32> to vector<8x1xf32>
    %14 = arith.addf %11, %13 : vector<8x1xf32>
    %cst_6 = arith.constant 1.000000e+00 : f32
    %15 = vector.broadcast %cst_6 : f32 to vector<8x1xf32>
    %16 = arith.maximumf %14, %15 : vector<8x1xf32>
    %17 = arith.divf %13, %16 : vector<8x1xf32>
    %cst_7 = arith.constant 1.100000e+00 : f32
    %18 = vector.broadcast %cst_7 : f32 to vector<8x1xf32>
    %19 = arith.mulf %18, %11 : vector<8x1xf32>
    %20 = arith.divf %19, %16 : vector<8x1xf32>
    %21 = vector.broadcast %17 : vector<8x1xf32> to vector<8x256xf32>
    %22 = arith.mulf %21, %5 : vector<8x256xf32>
    %23 = vector.broadcast %20 : vector<8x1xf32> to vector<8x256xf32>
    %24 = arith.mulf %23, %9 : vector<8x256xf32>
    %25 = arith.addf %22, %24 : vector<8x256xf32>
    %cst_8 = arith.constant 0.000000e+00 : f32
    %26 = vector.broadcast %cst_8 : f32 to vector<8x256xf32>
    %27 = arith.maximumf %0, %26 : vector<8x256xf32>
    %28 = arith.mulf %0, %1 : vector<8x256xf32>
    %29 = arith.subf %27, %28 : vector<8x256xf32>
    %30 = math.absf %0 : vector<8x256xf32>
    %cst_9 = arith.constant 0.000000e+00 : f32
    %31 = vector.broadcast %cst_9 : f32 to vector<8x256xf32>
    %32 = arith.subf %31, %30 : vector<8x256xf32>
    %33 = math.exp %32 : vector<8x256xf32>
    %34 = math.log1p %33 : vector<8x256xf32>
    %35 = arith.addf %29, %34 : vector<8x256xf32>
    %36 = arith.mulf %25, %35 : vector<8x256xf32>
    %37 = vector.shape_cast %36 : vector<8x256xf32> to vector<1x8x256xf32>
    %cst_10 = arith.constant dense<0.000000e+00> : vector<1xf32>
    %38 = vector.multi_reduction <add>, %37, %cst_10 [1, 2] : vector<1x8x256xf32> to vector<1xf32>
    %39 = vector.shape_cast %38 : vector<1xf32> to vector<1x1x1xf32>
    %40 = vector.extract %39[0, 0, 0] : f32 from vector<1x1x1xf32>
    %41 = tpu.iota {dimensions = array<i32: 0>} : vector<8x128xi32>
    %42 = tpu.iota {dimensions = array<i32: 1>} : vector<8x128xi32>
    %c0_i32 = arith.constant 0 : i32
    %43 = vector.broadcast %c0_i32 : i32 to vector<8x128xi32>
    %44 = arith.cmpi eq, %41, %43 : vector<8x128xi32>
    %c0_i32_11 = arith.constant 0 : i32
    %45 = vector.broadcast %c0_i32_11 : i32 to vector<8x128xi32>
    %46 = arith.cmpi eq, %42, %45 : vector<8x128xi32>
    %47 = arith.andi %44, %46 : vector<8x128xi1>
    %cst_12 = arith.constant 0.000000e+00 : f32
    %48 = vector.broadcast %40 : f32 to vector<8x128xf32>
    %49 = vector.broadcast %cst_12 : f32 to vector<8x128xf32>
    %50 = arith.select %47, %48, %49 : vector<8x128xi1>, vector<8x128xf32>
    %c0_13 = arith.constant 0 : index
    %c0_14 = arith.constant 0 : index
    %51 = vector.load %arg3[%c0_13, %c0_14] : memref<8x128xf32, #tpu.memory_space<vmem>>, vector<8x128xf32>
    tpu.vector_store %arg3[%c0_13, %c0_14], %50 {strides = array<i32>} : memref<8x128xf32, #tpu.memory_space<vmem>>, vector<8x128xf32>,
    return
  }
  func.func @transform_0(%arg0: i32) -> (i32, i32) {
    %c0_i32 = arith.constant 0 : i32
    %c0_i32_0 = arith.constant 0 : i32
    return %arg0, %c0_i32 : i32, i32
  }
  func.func @transform_1(%arg0: i32) -> (i32, i32) {
    %c0_i32 = arith.constant 0 : i32
    %c0_i32_0 = arith.constant 0 : i32
    return %arg0, %c0_i32 : i32, i32
  }
  func.func @transform_2(%arg0: i32) -> (i32, i32) {
    %c0_i32 = arith.constant 0 : i32
    %c0_i32_0 = arith.constant 0 : i32
    return %arg0, %c0_i32 : i32, i32
  }
}

</mosaic_0001>

<llo_original>
// kernel: tpu_custom_call.1
$region0: #{tpu_custom_call.1}
  #allocation0 [shape = 'u32[]', space=smem, size = 0x4, offset = 0x4, fixed_abs, tag = 'smem constant byte address 0x4 - core index']
  #allocation1 [shape = 'u32[144,128]{1,0:T(1,128)}', space=vmem, size = 0x12000, scoped, tag = 'internal scratch']
  %s0 = inlined_call_operand.hbm [shape: f32[8,256], index: 0, kind: input, shape index: {}]
  %s1 = inlined_call_operand.hbm [shape: f32[8,256], index: 1, kind: input, shape index: {}]
  %s2 = inlined_call_operand.hbm [shape: f32[8,128], index: 2, kind: output, shape index: {}]
  %s3 = sld [smem:[#allocation0]]
  $region26: #{tpu_custom_call.1} parent=0
    _
  %s5 = ssub.s32 1, %s3
  %s6 = scalar_select 0, %s5, %s3
  $region1: #{tpu_custom_call.1} parent=0
    #allocation2 [shape = 'u8[8192]{0}', space=vmem, size = 0x2000, scoped, tag = 'input window, operand 0, single buffered']
    #allocation3 [shape = 's32[1]{0}', space=sflag, size = 0x4, scoped, tag = 'scoped memory for tpu_custom_call.1']
    #allocation4 [shape = 's32[1]{0}', space=sflag, size = 0x4, scoped, tag = 'scoped memory for tpu_custom_call.1']
    #allocation5 [shape = 'u8[8192]{0}', space=vmem, size = 0x2000, scoped, tag = 'input window, operand 1, single buffered']
    #allocation6 [shape = 's32[1]{0}', space=sflag, size = 0x4, scoped, tag = 'scoped memory for tpu_custom_call.1']
    #allocation7 [shape = 'u8[4096]{0}', space=vmem, size = 0x1000, scoped, tag = 'output window, operand 0, single buffered']
    %7 = vsyncpa [#allocation3], 0
    %8 = vsyncpa [#allocation6], 0
    %9 = vsyncpa [#allocation4], 0
    // Predicated region
    $region2: #{tpu_custom_call.1} parent=1 // pred_check
      _
    $region3: #{tpu_custom_call.1} parent=1 // pred_check_branch
      %11 = sbr.rel (0) target = $region5
    $region4: #{tpu_custom_call.1} parent=1 // pred_region
      %s13 = ssub.s32 256, 256
      %14 = vsyncadd [#allocation3], %s13
      %s16 = sshll.u32 [#allocation2], 4
      %s17 = int_to_ptr.vmem [resolvable:$true] %s16
      %19 = dma.hbm_to_vmem [thread:$0]  %s0, 256, %s17, [#allocation3]
    $region5: #{tpu_custom_call.1} parent=1 // pred_fallthru
      _
    // Predicated region
    $region6: #{tpu_custom_call.1} parent=1 // pred_check
      _
    $region7: #{tpu_custom_call.1} parent=1 // pred_check_branch
      %21 = sbr.rel (0) target = $region9
    $region8: #{tpu_custom_call.1} parent=1 // pred_region
      %s23 = ssub.s32 256, 256
      %24 = vsyncadd [#allocation6], %s23
      %s26 = sshll.u32 [#allocation5], 4
      %s27 = int_to_ptr.vmem [resolvable:$true] %s26
      %29 = dma.hbm_to_vmem [thread:$0]  %s1, 256, %s27, [#allocation6]
    $region9: #{tpu_custom_call.1} parent=1 // pred_fallthru
      _
    // Predicated region
    $region10: #{tpu_custom_call.1} parent=1 // pred_check
      _
    $region11: #{tpu_custom_call.1} parent=1 // pred_check_branch
      %31 = sbr.rel (0) target = $region13
    $region12: #{tpu_custom_call.1} parent=1 // pred_region
      %32 = dma.done [#allocation3], 256
    $region13: #{tpu_custom_call.1} parent=1 // pred_fallthru
      _
    // Predicated region
    $region14: #{tpu_custom_call.1} parent=1 // pred_check
      _
    $region15: #{tpu_custom_call.1} parent=1 // pred_check_branch
      %34 = sbr.rel (0) target = $region17
    $region16: #{tpu_custom_call.1} parent=1 // pred_region
      %35 = dma.done [#allocation6], 256
    $region17: #{tpu_custom_call.1} parent=1 // pred_fallthru
      _
    %v36 = vld [vmem:[#allocation2] sm:$0xff]
    %v37 = vld [vmem:[#allocation2 + $0x8] sm:$0xff]
    %v38 = vld [vmem:[#allocation5] sm:$0xff]
    %v39 = vld [vmem:[#allocation5 + $0x8] sm:$0xff]
    %vm40 = vcmp.eq.f32.partialorder %v38, 1.0
    %vm41 = vcmp.eq.f32.partialorder %v39, 1.0
    %v42 = vsel %vm40, 1, 0
    %v43 = vsel %vm41, 1, 0
    %v44 = vcvt.s32.f32 %v42
    %v45 = vcvt.s32.f32 %v43
    %vm46 = vcmp.eq.f32.partialorder %v38, 0.0
    %vm47 = vcmp.eq.f32.partialorder %v39, 0.0
    %v48 = vsel %vm46, 1, 0
    %v49 = vsel %vm47, 1, 0
    %v50 = vcvt.s32.f32 %v48
    %v51 = vcvt.s32.f32 %v49
    %v52 = vadd.f32 %v44, %v45
    %53 = vadd.xlane.f32.xlu0 %v52
    %v54 = vpop.xlane.xlu0 %53
    %v55 = vadd.f32 %v50, %v51
    %56 = vadd.xlane.f32.xlu0 %v55
    %v57 = vpop.xlane.xlu0 %56
    %v58 = vadd.f32 %v54, %v57
    %v59 = vmax.f32 %v58, 1.0
    %v60 = vrcp.pop %v59
    %v61 = vmul.f32 %v57, %v60
    %v62 = vmul.f32 %v54, 1.1
    %v63 = vmul.f32 %v62, %v60
    %v64 = vmul.f32 %v61, %v44
    %v65 = vmul.f32 %v61, %v45
    %v66 = vmul.f32 %v63, %v50
    %v67 = vmul.f32 %v63, %v51
    %v68 = vadd.f32 %v64, %v66
    %v69 = vadd.f32 %v65, %v67
    %v70 = vmax.f32 %v36, 0.0
    %v71 = vmax.f32 %v37, 0.0
    %v72 = vmul.f32 %v36, %v38
    %v73 = vmul.f32 %v37, %v39
    %v74 = vsub.f32 %v70, %v72
    %v75 = vsub.f32 %v71, %v73
    %v76 = vand.u32 2147483647, %v36
    %v77 = vand.u32 2147483647, %v37
    %v78 = vsub.f32 0.0, %v76
    %v79 = vsub.f32 0.0, %v77
    %v80 = vmul.f32 %v78, 1.442695
    %v81 = vpow.pop %v80
    %v82 = vmul.f32 %v79, 1.442695
    %v83 = vpow.pop %v82
    %v84 = vadd.f32 %v81, 1.0
    %v85 = vlog2.pop %v84
    %v86 = vmul.f32 %v85, 0.6931472
    %v87 = vmul.f32 -0.5, %v81
    %v88 = vadd.f32 %v87, 1.0
    %v89 = vmul.f32 %v88, %v81
    %v90 = vand.u32 2147483647, %v81
    %vm91 = vcmp.lt.f32.partialorder %v90, 0.0004427343
    %v92 = vsel %vm91, %v89, %v86
    %v93 = vadd.f32 %v83, 1.0
    %v94 = vlog2.pop %v93
    %v95 = vmul.f32 %v94, 0.6931472
    %v96 = vmul.f32 -0.5, %v83
    %v97 = vadd.f32 %v96, 1.0
    %v98 = vmul.f32 %v97, %v83
    %v99 = vand.u32 2147483647, %v83
    %vm100 = vcmp.lt.f32.partialorder %v99, 0.0004427343
    %v101 = vsel %vm100, %v98, %v95
    %v102 = vadd.f32 %v74, %v92
    %v103 = vadd.f32 %v75, %v101
    %v104 = vmul.f32 %v68, %v102
    %v105 = vmul.f32 %v69, %v103
    %v106 = vadd.f32 %v104, %v105
    %107 = vadd.xlane.f32.xlu0 %v106
    %v108 = vpop.xlane.xlu0 %107
    %v109 = vrot.slane %v108, 4
    %v110 = vadd.f32 %v108, %v109
    %v111 = vrot.slane %v110, 2
    %v112 = vadd.f32 %v110, %v111
    %v113 = vrot.slane %v112, 1
    %v114 = vadd.f32 %v112, %v113
    %s115 = vtos %v114
    %v116 = vlaneseq
    %v117 = vshrl.u32 %v116, 7
    %v118 = vlaneseq
    %v119 = vand.u32 %v118, 127
    %vm120 = vcmp.eq.s32.totalorder %v117, 0
    %vm121 = vcmp.eq.s32.totalorder %v119, 0
    %vm122 = vmand %vm120, %vm121
    %v123 = vstv %s115
    %v124 = vsel %vm122, %v123, 0.0
    %125 = vst [vmem:[#allocation7] sm:$0xff] %v124
    // Predicated region
    $region18: #{tpu_custom_call.1} parent=1 // pred_check
      _
    $region19: #{tpu_custom_call.1} parent=1 // pred_check_branch
      %127 = sbr.rel (0) target = $region21
    $region20: #{tpu_custom_call.1} parent=1 // pred_region
      %s129 = ssub.s32 128, 128
      %130 = vsyncadd [#allocation4], %s129
      %s132 = sshll.u32 [#allocation7], 4
      %s133 = int_to_ptr.vmem [resolvable:$true] %s132
      %135 = dma.vmem_to_hbm [thread:$0]  %s133, 128, %s2, [#allocation4]
    $region21: #{tpu_custom_call.1} parent=1 // pred_fallthru
      _
    // Predicated region
    $region22: #{tpu_custom_call.1} parent=1 // pred_check
      _
    $region23: #{tpu_custom_call.1} parent=1 // pred_check_branch
      %137 = sbr.rel (0) target = $region25
    $region24: #{tpu_custom_call.1} parent=1 // pred_region
      %138 = dma.done [#allocation4], 128
    $region25: #{tpu_custom_call.1} parent=1 // pred_fallthru
      _
    %139 = vsyncpa [#allocation3], 1
    %140 = vsyncpa [#allocation6], 1
    %141 = vsyncpa [#allocation4], 1

</llo_original>
